<compile_context>
chip_gen: v5e
topology: v5e:2x2
jax: 0.10.0
libtpu: 0.0.40
codegen_flags: <defaults>
</compile_context>

<pallas_src>
import functools

import jax
import jax.numpy as jnp
from jax import lax
from jax.experimental import pallas as pl
from jax.experimental.pallas import tpu as pltpu


def _round_up(x, m):
    return (x + m - 1) // m * m


def _default_vmem_limit_bytes():
    cap = 128 * 1024 * 1024
    try:
        info = pltpu.get_tpu_info()
        cap = int(getattr(info, "vmem_capacity_bytes", cap))
    except Exception:
        pass
    # Leave >=16 MiB headroom for compiler scratch / spilled temporaries.
    return int(max(32 * 1024 * 1024, min(cap - 16 * 1024 * 1024, 100 * 1024 * 1024)))


def _vq_kernel(z_ref, cb_ref, zq_ref, err_ref, *,
               tm, tk, nk, k_pad, hw, need_mask, use_bf16_cross):
    """Nearest-codebook-entry quantization on one (C, TM) spatial slab.

    z_ref:   (C, TM)        input slab (channels on sublanes, spatial on lanes)
    cb_ref:  (K_pad, C+1)   augmented codebook [-2*E | ||E||^2], f32, resident
    zq_ref:  (C, TM)        quantized output slab
    err_ref: (8, 128)       per-tile sum((z_q - z)^2), splatted (lane-dense vst)
    """
    c = z_ref.shape[0]
    z = z_ref[...].astype(jnp.float32)                          # (C, TM)
    ones = jnp.ones((1, tm), jnp.float32)
    z_aug = jnp.concatenate([z, ones], axis=0)                  # (C+1, TM)
    z_mm = z_aug.astype(jnp.bfloat16) if use_bf16_cross else z_aug

    # Hoisted out of the chunk loop (JAX does not CSE broadcast_in_dim).
    row_ids = lax.broadcasted_iota(jnp.int32, (tk, tm), 0)

    def k_chunk(kk, carry):
        min_d, best_idx = carry
        start = kk * tk
        if not isinstance(start, int):
            start = pl.multiple_of(start, tk)
        cb_c = cb_ref[pl.ds(start, tk), :]                      # (TK, C+1) f32
        lhs = cb_c.astype(jnp.bfloat16) if use_bf16_cross else cb_c
        # dist = ||e||^2 - 2<z,e>, straight off the MXU (f32 accumulate).
        dist = lax.dot_general(lhs, z_mm, (((1,), (0,)), ((), ())),
                               preferred_element_type=jnp.float32)   # (TK, TM)

        # argmin over the chunk with first-index tie-breaking (matches torch);
        # min and equality are on the identical dist tensor.
        c_min = jnp.min(dist, axis=0, keepdims=True)            # (1, TM)
        c_idx = jnp.min(jnp.where(dist == c_min, row_ids, tk),
                        axis=0, keepdims=True)                  # (1, TM) local

        better = c_min < min_d          # strict '<': earlier chunk wins on ties
        best_idx = jnp.where(better, c_idx + kk * tk, best_idx)
        min_d = jnp.where(better, c_min, min_d)
        return (min_d, best_idx)

    init = (jnp.full((1, tm), jnp.inf, jnp.float32),
            jnp.zeros((1, tm), jnp.int32))
    if nk == 1:
        _, best_idx = k_chunk(0, init)
    else:
        _, best_idx = lax.fori_loop(0, nk, k_chunk, init, unroll=nk <= 8)

    # Single exact gather of the winning rows over the full resident codebook:
    # one-hot f32 matmul against -2*E, then an exact rescale by -0.5.
    all_rows = lax.broadcasted_iota(jnp.int32, (k_pad, tm), 0)
    onehot = (all_rows == best_idx).astype(jnp.float32)          # (K_pad, TM)
    cb_neg2 = cb_ref[:, :c]                                      # (K_pad, C) = -2*E
    zq = -0.5 * lax.dot_general(cb_neg2, onehot, (((0,), (0,)), ((), ())),
                                preferred_element_type=jnp.float32)  # (C, TM)

    diff = zq - z
    if need_mask:
        col = pl.program_id(1) * tm + lax.broadcasted_iota(jnp.int32, (1, tm), 1)
        diff = jnp.where(col < hw, diff, 0.0)

    zq_ref[...] = zq.astype(zq_ref.dtype)
    part = jnp.sum(diff * diff, keepdims=True)                   # (1, 1)
    err_ref[...] = jnp.broadcast_to(part, (8, 128))              # unmasked vst


def vector_quantizer_forward(z_nchw, codebook, beta=0.25, *,
                             tile_m=1024, use_bf16_cross=True):
    """Forward pass matching VectorQuantizer.forward(z) -> (z_q, commit_loss)."""
    N, C, H, W = z_nchw.shape
    K, D = codebook.shape
    assert D == C, "codebook dim must equal channel count"
    HW = H * W

    # --- spatial (lane) tiling: lane-dense, tm divides round_up(HW,128) so
    #     there is never padding overshoot beyond the minimal 128 rounding ---
    hw_pad = _round_up(HW, 128)
    n_blocks = hw_pad // 128
    max_blocks = max(1, min(n_blocks, _round_up(tile_m, 128) // 128))
    blocks_per_tile = max(b for b in range(1, max_blocks + 1) if n_blocks % b == 0)
    tm = blocks_per_tile * 128
    num_m = n_blocks // blocks_per_tile

    z3 = z_nchw.reshape(N, C, HW)          # pure reshape, no transpose
    if hw_pad != HW:
        z3 = jnp.pad(z3, ((0, 0), (0, 0), (0, hw_pad - HW)))

    # --- codebook chunking; augmented layout folds ||e||^2 and -2 into the MXU.
    #     Padded rows get +inf in the ||e||^2 slot so they can never win. ---
    tk = _round_up(K, 8) if K <= 256 else 256
    k_pad = _round_up(K, tk)
    nk = k_pad // tk

    cb = codebook.astype(jnp.float32)
    cb_sq = jnp.sum(cb * cb, axis=1, keepdims=True)              # (K, 1)
    cb_aug = jnp.concatenate([-2.0 * cb, cb_sq], axis=1)         # (K, C+1)
    if k_pad != K:
        cb_aug = jnp.pad(cb_aug, ((0, k_pad - K), (0, 0)))
        cb_aug = cb_aug.at[K:, C].set(jnp.inf)                   # sentinel rows

    kernel = functools.partial(
        _vq_kernel, tm=tm, tk=tk, nk=nk, k_pad=k_pad, hw=HW,
        need_mask=(hw_pad != HW), use_bf16_cross=use_bf16_cross)

    bytes_per = 4
    cost = pl.CostEstimate(
        flops=2 * N * hw_pad * k_pad * (2 * C + 1),
        transcendentals=0,
        bytes_accessed=(2 * N * C * hw_pad + k_pad * (C + 1)
                        + N * num_m * 8 * 128) * bytes_per)

    zq3, err = pl.pallas_call(
        kernel,
        grid=(N, num_m),
        in_specs=[
            pl.BlockSpec((None, C, tm), lambda n, i: (n, 0, i)),       # z slab
            pl.BlockSpec((k_pad, C + 1), lambda n, i: (0, 0)),         # codebook (resident)
        ],
        out_specs=(
            pl.BlockSpec((None, C, tm), lambda n, i: (n, 0, i)),       # z_q slab
            pl.BlockSpec((None, None, 8, 128), lambda n, i: (n, i, 0, 0)),  # err partials
        ),
        out_shape=(
            jax.ShapeDtypeStruct((N, C, hw_pad), z_nchw.dtype),
            jax.ShapeDtypeStruct((N, num_m, 8, 128), jnp.float32),
        ),
        compiler_params=pltpu.CompilerParams(
            dimension_semantics=("parallel", "parallel"),
            vmem_limit_bytes=_default_vmem_limit_bytes(),
        ),
        cost_estimate=cost,
    )(z3, cb_aug)

    err_sum = jnp.sum(err[:, :, 0, 0])
    # commit_loss = mse(z_q.detach(), z) + beta * mse(z_q, z.detach())
    #             = (1 + beta) * mean((z_q - z)^2)   (forward value)
    commit_loss = (1.0 + beta) * err_sum / jnp.float32(N * C * H * W)

    z_q = zq3[:, :, :HW].reshape(N, C, H, W)
    # TODO(synk): training would need a custom_vjp (straight-through estimator
    # plus the separate detach() loss terms); this implements forward values only.
    return z_q, commit_loss


def _reference(z, codebook, beta):
    """Pure-JAX f32 reference of the PyTorch forward."""
    N, C, H, W = z.shape
    z_flat = jnp.transpose(z, (0, 2, 3, 1)).reshape(-1, C)
    dist = (jnp.sum(z_flat ** 2, axis=1, keepdims=True)
            + jnp.sum(codebook ** 2, axis=1)[None, :]
            - 2.0 * z_flat @ codebook.T)
    idx = jnp.argmin(dist, axis=-1)
    zq = jnp.transpose(codebook[idx].reshape(N, H, W, C), (0, 3, 1, 2))
    loss = (1.0 + beta) * jnp.mean((zq - z) ** 2)
    return zq, loss


if __name__ == "__main__":
    key = jax.random.PRNGKey(0)
    k_z, k_cb, k_z2, k_cb2 = jax.random.split(key, 4)
    beta = 0.25

    # --- test 1: small shapes from the module; exact check vs f32 reference ---
    N, C, H, W = 2, 4, 16, 16
    num_codebook = 64
    z = jax.random.normal(k_z, (N, C, H, W), dtype=jnp.float32)
    codebook = jax.random.uniform(
        k_cb, (num_codebook, C), dtype=jnp.float32,
        minval=-1.0 / num_codebook, maxval=1.0 / num_codebook)

    z_q, commit_loss = vector_quantizer_forward(
        z, codebook, beta=beta, use_bf16_cross=False)
    jax.block_until_ready((z_q, commit_loss))

    zq_ref, loss_ref = _reference(z, codebook, beta)
    assert jnp.allclose(z_q, zq_ref, atol=1e-5), "z_q mismatch vs reference"
    assert jnp.allclose(commit_loss, loss_ref, rtol=1e-5, atol=1e-7), "loss mismatch"

    # --- test 2: multi-chunk K (nk > 1), non-128-multiple spatial (masking) ---
    N2, C2, H2, W2 = 1, 4, 10, 10
    K2 = 320
    z2 = jax.random.normal(k_z2, (N2, C2, H2, W2), dtype=jnp.float32)
    cb2 = jax.random.uniform(k_cb2, (K2, C2), dtype=jnp.float32,
                             minval=-1.0 / K2, maxval=1.0 / K2)
    z_q2, loss2 = vector_quantizer_forward(z2, cb2, beta=beta, use_bf16_cross=False)
    jax.block_until_ready((z_q2, loss2))
    zq2_ref, loss2_ref = _reference(z2, cb2, beta)
    assert jnp.allclose(z_q2, zq2_ref, atol=1e-5), "z_q mismatch (multi-chunk)"
    assert jnp.allclose(loss2, loss2_ref, rtol=1e-5, atol=1e-7), "loss mismatch (multi-chunk)"

    # --- test 3: default fast path (bf16 distance matmul); near-ties may pick a
    #     different (equally close) entry, so only sanity-check it ---
    z_q_fast, loss_fast = vector_quantizer_forward(z, codebook, beta=beta)
    jax.block_until_ready((z_q_fast, loss_fast))
    assert z_q_fast.shape == z.shape
    assert bool(jnp.isfinite(loss_fast)), "non-finite loss on bf16 path"

    print("KERNEL_OK")
</pallas_src>

<mosaic_0001>
module attributes {stable_mosaic.version = 11 : i64} {
  func.func @_vq_kernel(%arg0: i32, %arg1: i32, %arg2: memref<1x4x256xf32, #tpu.memory_space<vmem>>, %arg3: memref<64x5xf32, #tpu.memory_space<vmem>>, %arg4: memref<1x4x256xf32, #tpu.memory_space<vmem>>, %arg5: memref<1x1x8x128xf32, #tpu.memory_space<vmem>>) attributes {dimension_semantics = [#tpu.dimension_semantics<parallel>, #tpu.dimension_semantics<parallel>], iteration_bounds = array<i64: 2, 1>, scalar_prefetch = 0 : i64, scratch_operands = 0 : i64, tpu.core_type = #tpu.core_type<tc>, window_params = [{transform_indices = @transform_0, window_bounds = array<i64: 1, 4, 256>}, {pipeline_mode = #tpu.pipeline_mode<synchronous>, transform_indices = @transform_1, window_bounds = array<i64: 64, 5>}, {transform_indices = @transform_2, window_bounds = array<i64: 1, 4, 256>}, {transform_indices = @transform_3, window_bounds = array<i64: 1, 1, 8, 128>}]} {
    %c0 = arith.constant 0 : index
    %c0_0 = arith.constant 0 : index
    %c0_1 = arith.constant 0 : index
    %0 = vector.load %arg2[%c0, %c0_0, %c0_1] : memref<1x4x256xf32, #tpu.memory_space<vmem>>, vector<1x4x256xf32>
    %1 = vector.shape_cast %0 : vector<1x4x256xf32> to vector<4x256xf32>
    %cst = arith.constant 1.000000e+00 : f32
    %2 = vector.broadcast %cst : f32 to vector<1x256xf32>
    %3 = tpu.concatenate %1, %2 in 0 : vector<4x256xf32>, vector<1x256xf32> -> vector<5x256xf32>
    %4 = tpu.iota {dimensions = array<i32: 0>} : vector<64x256xi32>
    %cst_2 = arith.constant 0x7F800000 : f32
    %5 = vector.broadcast %cst_2 : f32 to vector<1x256xf32>
    %c0_i32 = arith.constant 0 : i32
    %6 = vector.broadcast %c0_i32 : i32 to vector<1x256xi32>
    %c0_3 = arith.constant 0 : index
    %c0_4 = arith.constant 0 : index
    %7 = vector.load %arg3[%c0_3, %c0_4] : memref<64x5xf32, #tpu.memory_space<vmem>>, vector<64x5xf32>
    %cst_5 = arith.constant dense<0.000000e+00> : vector<64x256xf32>
    %8 = tpu.matmul %7, %3, %cst_5 {dimension_numbers = #tpu.dot_dimension_numbers<[1], [0], [0], [1], [0, 0, 1, 1], [], []>} : vector<64x5xf32>, vector<5x256xf32>, vector<64x256xf32> -> vector<64x256xf32>
    %cst_6 = arith.constant dense<0x7F800000> : vector<256xf32>
    %9 = vector.multi_reduction <minimumf>, %8, %cst_6 [0] : vector<64x256xf32> to vector<256xf32>
    %10 = vector.shape_cast %9 : vector<256xf32> to vector<1x256xf32>
    %11 = vector.broadcast %10 : vector<1x256xf32> to vector<64x256xf32>
    %12 = arith.cmpf oeq, %8, %11 : vector<64x256xf32>
    %c64_i32 = arith.constant 64 : i32
    %13 = vector.broadcast %c64_i32 : i32 to vector<64x256xi32>
    %14 = arith.select %12, %4, %13 : vector<64x256xi1>, vector<64x256xi32>
    %cst_7 = arith.constant dense<2147483647> : vector<256xi32>
    %15 = vector.multi_reduction <minsi>, %14, %cst_7 [0] : vector<64x256xi32> to vector<256xi32>
    %16 = vector.shape_cast %15 : vector<256xi32> to vector<1x256xi32>
    %17 = arith.cmpf olt, %10, %5 : vector<1x256xf32>
    %c0_i32_8 = arith.constant 0 : i32
    %18 = vector.broadcast %c0_i32_8 : i32 to vector<1x256xi32>
    %19 = arith.addi %16, %18 : vector<1x256xi32>
    %20 = arith.select %17, %19, %6 : vector<1x256xi1>, vector<1x256xi32>
    %21 = tpu.iota {dimensions = array<i32: 0>} : vector<64x256xi32>
    %22 = vector.broadcast %20 : vector<1x256xi32> to vector<64x256xi32>
    %23 = arith.cmpi eq, %21, %22 : vector<64x256xi32>
    %24 = arith.extui %23 : vector<64x256xi1> to vector<64x256xi32>
    %25 = arith.sitofp %24 : vector<64x256xi32> to vector<64x256xf32>
    %c0_9 = arith.constant 0 : index
    %c0_10 = arith.constant 0 : index
    %26 = vector.load %arg3[%c0_9, %c0_10] : memref<64x5xf32, #tpu.memory_space<vmem>>, vector<64x4xf32>
    %cst_11 = arith.constant dense<0.000000e+00> : vector<4x256xf32>
    %27 = tpu.matmul %26, %25, %cst_11 {dimension_numbers = #tpu.dot_dimension_numbers<[0], [0], [1], [1], [0, 1, 1, 1], [], []>} : vector<64x4xf32>, vector<64x256xf32>, vector<4x256xf32> -> vector<4x256xf32>
    %cst_12 = arith.constant -5.000000e-01 : f32
    %28 = vector.broadcast %cst_12 : f32 to vector<4x256xf32>
    %29 = arith.mulf %28, %27 : vector<4x256xf32>
    %30 = arith.subf %29, %1 : vector<4x256xf32>
    %c0_13 = arith.constant 0 : index
    %c0_14 = arith.constant 0 : index
    %c0_15 = arith.constant 0 : index
    %31 = vector.load %arg4[%c0_13, %c0_14, %c0_15] : memref<1x4x256xf32, #tpu.memory_space<vmem>>, vector<1x4x256xf32>
    %32 = vector.shape_cast %31 : vector<1x4x256xf32> to vector<4x256xf32>
    %33 = vector.shape_cast %29 : vector<4x256xf32> to vector<1x4x256xf32>
    tpu.vector_store %arg4[%c0_13, %c0_14, %c0_15], %33 {strides = array<i32>} : memref<1x4x256xf32, #tpu.memory_space<vmem>>, vector<1x4x256xf32>,
    %34 = arith.mulf %30, %30 : vector<4x256xf32>
    %35 = vector.shape_cast %34 : vector<4x256xf32> to vector<1x4x256xf32>
    %cst_16 = arith.constant dense<0.000000e+00> : vector<1xf32>
    %36 = vector.multi_reduction <add>, %35, %cst_16 [1, 2] : vector<1x4x256xf32> to vector<1xf32>
    %37 = vector.shape_cast %36 : vector<1xf32> to vector<1x1x1xf32>
    %38 = vector.extract %37[0, 0, 0] : f32 from vector<1x1x1xf32>
    %39 = vector.broadcast %38 : f32 to vector<1x1xf32>
    %40 = vector.shape_cast %39 : vector<1x1xf32> to vector<1x1xf32>
    %41 = vector.broadcast %40 : vector<1x1xf32> to vector<8x128xf32>
    %c0_17 = arith.constant 0 : index
    %c0_18 = arith.constant 0 : index
    %c0_19 = arith.constant 0 : index
    %c0_20 = arith.constant 0 : index
    %42 = vector.load %arg5[%c0_17, %c0_18, %c0_19, %c0_20] : memref<1x1x8x128xf32, #tpu.memory_space<vmem>>, vector<1x1x8x128xf32>
    %43 = vector.shape_cast %42 : vector<1x1x8x128xf32> to vector<8x128xf32>
    %44 = vector.shape_cast %41 : vector<8x128xf32> to vector<1x1x8x128xf32>
    tpu.vector_store %arg5[%c0_17, %c0_18, %c0_19, %c0_20], %44 {strides = array<i32>} : memref<1x1x8x128xf32, #tpu.memory_space<vmem>>, vector<1x1x8x128xf32>,
    return
  }
  func.func @transform_0(%arg0: i32, %arg1: i32) -> (i32, i32, i32) {
    %c0_i32 = arith.constant 0 : i32
    %c0_i32_0 = arith.constant 0 : i32
    return %arg0, %c0_i32, %arg1 : i32, i32, i32
  }
  func.func @transform_1(%arg0: i32, %arg1: i32) -> (i32, i32) {
    %c0_i32 = arith.constant 0 : i32
    %c0_i32_0 = arith.constant 0 : i32
    %c0_i32_1 = arith.constant 0 : i32
    return %c0_i32, %c0_i32_0 : i32, i32
  }
  func.func @transform_2(%arg0: i32, %arg1: i32) -> (i32, i32, i32) {
    %c0_i32 = arith.constant 0 : i32
    %c0_i32_0 = arith.constant 0 : i32
    return %arg0, %c0_i32, %arg1 : i32, i32, i32
  }
  func.func @transform_3(%arg0: i32, %arg1: i32) -> (i32, i32, i32, i32) {
    %c0_i32 = arith.constant 0 : i32
    %c0_i32_0 = arith.constant 0 : i32
    %c0_i32_1 = arith.constant 0 : i32
    return %arg0, %arg1, %c0_i32, %c0_i32_0 : i32, i32, i32, i32
  }
}

</mosaic_0001>

<llo_original>
// kernel: tpu_custom_call.1
$region0: #{tpu_custom_call.1}
  #allocation0 [shape = 'u32[]', space=smem, size = 0x4, offset = 0x4, fixed_abs, tag = 'smem constant byte address 0x4 - core index']
  #allocation1 [shape = 'u32[72,128]{1,0:T(1,128)}', space=vmem, size = 0x9000, scoped, tag = 'internal scratch']
  %s0 = inlined_call_operand.vmem [shape: f32[2,4,256], index: 0, kind: input, shape index: {}]
  %s1 = inlined_call_operand.vmem [shape: f32[64,5], index: 1, kind: input, shape index: {}]
  %s2 = inlined_call_operand.hbm [shape: f32[2,4,256], index: 2, kind: output, shape index: {0}]
  %s3 = inlined_call_operand.hbm [shape: f32[2,1,8,128], index: 3, kind: output, shape index: {1}]
  %4 = xla_tuple %s2, %s3
  %s5 = sld [smem:[#allocation0]]
  $region49: #{tpu_custom_call.1} parent=0
    _
  %s7 = ssub.s32 1, %s5
  %s8 = scalar_select 0, %s7, %s5
  $region1: #{tpu_custom_call.1} parent=0
    #allocation2 [shape = 'u8[8192]{0}', space=vmem, size = 0x2000, scoped, tag = 'output window, operand 0']
    #allocation3 [shape = 's32[2]{0}', space=sflag, size = 0x8, scoped, tag = 'scoped memory for tpu_custom_call.1']
    #allocation4 [shape = 'u8[8192]{0}', space=vmem, size = 0x2000, scoped, tag = 'output window, operand 1']
    #allocation5 [shape = 's32[2]{0}', space=sflag, size = 0x8, scoped, tag = 'scoped memory for tpu_custom_call.1']
    %9 = vsyncpa [#allocation3], 0
    %s10 = scalar_lea.sflag [#allocation3], 1
    %11 = vsyncpa %s10, 0
    %12 = vsyncpa [#allocation5], 0
    %s13 = scalar_lea.sflag [#allocation5], 1
    %14 = vsyncpa %s13, 0
    loop: start=0, step=1, limit=4
    $region2: #{tpu_custom_call.1} parent=1 // loop_pre_header
      _
    $region3: #{tpu_custom_call.1} parent=1 // loop_header
      %s16 = sphi 0, %s20
      %p17 = scmp.ge.s32.totalorder %s16, 4
      %s23 = sphi 0, %s35
      %s24 = sphi 0, %s31
      %s25 = sphi 0, %s23
      %s26 = sphi 0, %s24
      %s27 = sphi 0, %s25
      %s28 = sphi 0, %s26
      %s40 = sphi 0, %s42
      %s43 = sphi 0, %s40
      %s44 = sphi 0, %s43
      %s60 = sphi 0, %s44
      %s64 = sphi 0, %s64
      %s66 = sphi 0, %s64
      %s67 = sphi 0, %s66
      %s81 = sphi 0, %s67
      %s89 = sphi 0, %s91
      %s92 = sphi 0, %s89
      %s93 = sphi 0, %s92
      %s109 = sphi 0, %s93
      %s117 = sphi 0, %s119
      %s120 = sphi 0, %s117
      %s121 = sphi 0, %s120
      %s137 = sphi 0, %s121
    $region4: #{tpu_custom_call.1} parent=1 // loop_header_branch
      %19 = sbr.rel (%p17) target = $region8
    $region5: #{tpu_custom_call.1} parent=1 // loop_body
      %s21 = ssub.s32 %s16, 1
      %s22 = ssub.s32 %s16, 2
      %s29 = sadd.s32 1, %s24
      %p30 = scmp.ge.s32.totalorder %s29, 1
      %s31 = scalar_select %p30, 0, %s29
      %s32 = sadd.s32 1, %s23
      %s33 = scalar_select %p30, %s32, %s23
      %p34 = scmp.ge.s32.totalorder %s33, 2
      %s35 = scalar_select %p34, 0, %s33
      %s36 = ssub.s32 %s23, %s35
      %s37 = ssub.s32 %s24, %s31
      %s38 = sor.u32 %s36, %s37
      %p39 = scmp.eq.s32.totalorder %s38, 0
      %s41 = sadd.s32 %s40, 1
      %s42 = scalar_select %p39, %s40, %s41
      %p45 = pneg %p39
      %p46 = scmp.eq.s32.totalorder %s16, 1
      %p47 = por %p45, %p46
      %p48 = scmp.ne.s32.totalorder %s40, %s43
      %p49 = scmp.eq.s32.totalorder %s16, 0
      %p50 = por %p48, %p49
      %p51 = scmp.ne.s32.totalorder %s40, %s43
      %p52 = scmp.eq.s32.totalorder %s21, 1
      %p53 = por %p51, %p52
      %p54 = scmp.ne.s32.totalorder %s43, %s44
      %p55 = scmp.eq.s32.totalorder %s21, 0
      %p56 = por %p54, %p55
      %p57 = scmp.ne.s32.totalorder %s43, %s44
      %p58 = scmp.eq.s32.totalorder %s22, 1
      %p59 = por %p57, %p58
      %p61 = scmp.ne.s32.totalorder %s44, %s60
      %p62 = scmp.eq.s32.totalorder %s22, 0
      %p63 = por %p61, %p62
      %s65 = sadd.s32 %s64, 1
      %p68 = scmp.eq.s32.totalorder %s16, 1
      %p69 = scmp.ne.s32.totalorder %s64, %s66
      %p70 = scmp.eq.s32.totalorder %s16, 0
      %p71 = por %p69, %p70
      %p72 = scmp.ne.s32.totalorder %s64, %s66
      %p73 = scmp.eq.s32.totalorder %s21, 1
      %p74 = por %p72, %p73
      %p75 = scmp.ne.s32.totalorder %s66, %s67
      %p76 = scmp.eq.s32.totalorder %s21, 0
      %p77 = por %p75, %p76
      %p78 = scmp.ne.s32.totalorder %s66, %s67
      %p79 = scmp.eq.s32.totalorder %s22, 1
      %p80 = por %p78, %p79
      %p82 = scmp.ne.s32.totalorder %s67, %s81
      %p83 = scmp.eq.s32.totalorder %s22, 0
      %p84 = por %p82, %p83
      %s85 = ssub.s32 %s23, %s35
      %s86 = ssub.s32 %s24, %s31
      %s87 = sor.u32 %s85, %s86
      %p88 = scmp.eq.s32.totalorder %s87, 0
      %s90 = sadd.s32 %s89, 1
      %s91 = scalar_select %p88, %s89, %s90
      %p94 = pneg %p88
      %p95 = scmp.eq.s32.totalorder %s16, 1
      %p96 = por %p94, %p95
      %p97 = scmp.ne.s32.totalorder %s89, %s92
      %p98 = scmp.eq.s32.totalorder %s16, 0
      %p99 = por %p97, %p98
      %p100 = scmp.ne.s32.totalorder %s89, %s92
      %p101 = scmp.eq.s32.totalorder %s21, 1
      %p102 = por %p100, %p101
      %p103 = scmp.ne.s32.totalorder %s92, %s93
      %p104 = scmp.eq.s32.totalorder %s21, 0
      %p105 = por %p103, %p104
      %p106 = scmp.ne.s32.totalorder %s92, %s93
      %p107 = scmp.eq.s32.totalorder %s22, 1
      %p108 = por %p106, %p107
      %p110 = scmp.ne.s32.totalorder %s93, %s109
      %p111 = scmp.eq.s32.totalorder %s22, 0
      %p112 = por %p110, %p111
      %s113 = ssub.s32 %s23, %s35
      %s114 = ssub.s32 %s24, %s31
      %s115 = sor.u32 %s113, %s114
      %p116 = scmp.eq.s32.totalorder %s115, 0
      %s118 = sadd.s32 %s117, 1
      %s119 = scalar_select %p116, %s117, %s118
      %p122 = pneg %p116
      %p123 = scmp.eq.s32.totalorder %s16, 1
      %p124 = por %p122, %p123
      %p125 = scmp.ne.s32.totalorder %s117, %s120
      %p126 = scmp.eq.s32.totalorder %s16, 0
      %p127 = por %p125, %p126
      %p128 = scmp.ne.s32.totalorder %s117, %s120
      %p129 = scmp.eq.s32.totalorder %s21, 1
      %p130 = por %p128, %p129
      %p131 = scmp.ne.s32.totalorder %s120, %s121
      %p132 = scmp.eq.s32.totalorder %s21, 0
      %p133 = por %p131, %p132
      %p134 = scmp.ne.s32.totalorder %s120, %s121
      %p135 = scmp.eq.s32.totalorder %s22, 1
      %p136 = por %p134, %p135
      %p138 = scmp.ne.s32.totalorder %s121, %s137
      %p139 = scmp.eq.s32.totalorder %s22, 0
      %p140 = por %p138, %p139
      %p141 = scmp.le.s32.totalorder 1, %s16
      %p142 = scmp.lt.s32.totalorder %s16, 3
      %p143 = pnand %p141, %p142
      %p144 = pneg %p143
      // Predicated region
      $region9: #{tpu_custom_call.1} parent=5 // pred_check
        _
      $region10: #{tpu_custom_call.1} parent=5 // pred_check_branch
        %146 = sbr.rel (%p143) target = $region12
      $region11: #{tpu_custom_call.1} parent=5 // pred_region
        %s147 = ssub.s32 %s16, 1
        // Predicated region
        $region13: #{tpu_custom_call.1} parent=11 // pred_check
          %p148 = pneg %p77
        $region14: #{tpu_custom_call.1} parent=11 // pred_check_branch
          %150 = sbr.rel (%p148) target = $region16
        $region15: #{tpu_custom_call.1} parent=11 // pred_region
          _
        $region16: #{tpu_custom_call.1} parent=11 // pred_fallthru
          _
      $region12: #{tpu_custom_call.1} parent=5 // pred_fallthru
        _
      %p151 = scmp.lt.s32.totalorder %s16, 2
      // Predicated region
      $region17: #{tpu_custom_call.1} parent=5 // pred_check
        %p152 = pneg %p151
      $region18: #{tpu_custom_call.1} parent=5 // pred_check_branch
        %154 = sbr.rel (%p152) target = $region20
      $region19: #{tpu_custom_call.1} parent=5 // pred_region
        // Predicated region
        $region21: #{tpu_custom_call.1} parent=19 // pred_check
          %p155 = pneg %p50
        $region22: #{tpu_custom_call.1} parent=19 // pred_check_branch
          %157 = sbr.rel (%p155) target = $region24
        $region23: #{tpu_custom_call.1} parent=19 // pred_region
          %s158 = smul.u32 2, %s24
          %p159 = scmp.lt.s32.totalorder %s23, 1
          %s160 = scalar_select %p159, %s23, 1
          %p161 = scmp.lt.s32.totalorder %s158, 1
          %s162 = scalar_select %p161, %s158, 1
          %s163 = smul.addr %s160, 2
          %s164 = sadd.s32 %s162, %s163
          %s165 = smul.addr %s164, 4
          %s166 = scalar_lea.vmem %s0, %s165
          %s167 = smul.u32 2, %s24
        $region24: #{tpu_custom_call.1} parent=19 // pred_fallthru
          _
      $region20: #{tpu_custom_call.1} parent=5 // pred_fallthru
        _
      %p168 = scmp.le.s32.totalorder 1, %s16
      %p169 = scmp.lt.s32.totalorder %s16, 3
      %p170 = pnand %p168, %p169
      %p171 = pneg %p170
      // Predicated region
      $region25: #{tpu_custom_call.1} parent=5 // pred_check
        _
      $region26: #{tpu_custom_call.1} parent=5 // pred_check_branch
        %173 = sbr.rel (%p170) target = $region28
      $region27: #{tpu_custom_call.1} parent=5 // pred_region
        %s174 = ssub.s32 %s16, 1
        %s175 = smul.u32 2, %s26
        %p176 = scmp.lt.s32.totalorder %s25, 1
        %s177 = scalar_select %p176, %s25, 1
        %p178 = scmp.lt.s32.totalorder %s175, 1
        %s179 = scalar_select %p178, %s175, 1
        %s180 = smul.addr %s177, 2
        %s181 = sadd.s32 %s179, %s180
        %s182 = smul.addr %s181, 4
        %s183 = scalar_lea.vmem %s0, %s182
        %p184 = pneg %p56
        %p185 = pneg %p53
        %p186 = pneg %p77
        %p187 = pneg %p74
        %p188 = pneg %p105
        %p189 = pneg %p102
        %s190 = sand.u32 %s92, 1
        %s191 = scalar_lea.sflag [#allocation3], %s190
        %s192 = sand.u32 %s92, 1
        %s193 = smul.addr %s192, 8
        %s194 = scalar_lea.vmem [#allocation2], %s193
        %p195 = pneg %p133
        %p196 = pneg %p130
        %s197 = sand.u32 %s120, 1
        %s198 = scalar_lea.sflag [#allocation5], %s197
        %s199 = sand.u32 %s120, 1
        %s200 = smul.addr %s199, 8
        %s201 = scalar_lea.vmem [#allocation4], %s200
        %s202 = smul.u32 2, %s26
        %p203 = scmp.lt.s32.totalorder %s25, 1
        %s204 = scalar_select %p203, %s25, 1
        %p205 = scmp.lt.s32.totalorder %s202, 1
        %s206 = scalar_select %p205, %s202, 1
        %s207 = smul.addr %s204, 2
        %s208 = sadd.s32 %s206, %s207
        %s209 = smul.addr %s208, 4
        %s210 = scalar_lea.vmem %s0, %s209
        %s211 = smul.u32 2, %s26
        %s212 = smul.u32 2, %s26
        %v213 = vld [vmem:[%s210] sm:$0xff]
        %215 = vst [vmem:[#allocation1] ss:$2 sm:$0xff] %v213
        %v216 = vld.sshfl [vmem:[#allocation1] sm:$0xff pattern:$0x75316420]
        %v217 = vld.sshfl [vmem:[#allocation1 + $0x8] sm:$0xff pattern:$0x75316420]
        %vm220 = vcmask 1043456
        %v221 = vsel %vm220, %v216, 1.0
        %v222 = vsel %vm220, %v217, 1.0
        %v223 = vlaneseq
        %v224 = vshrl.u32 %v223, 7
        %v225 = vadd.s32 %v224, 8
        %v226 = vadd.s32 %v224, 16
        %v227 = vadd.s32 %v224, 24
        %v228 = vadd.s32 %v224, 32
        %v229 = vadd.s32 %v224, 40
        %v230 = vadd.s32 %v224, 48
        %v231 = vadd.s32 %v224, 56
        %v232 = vld [vmem:[%s1] sm:$0xff]
        %v233 = vld [vmem:[%s1 + $0x8] sm:$0xff]
        %v234 = vld [vmem:[%s1 + $0x10] sm:$0xff]
        %v235 = vld [vmem:[%s1 + $0x18] sm:$0xff]
        %v236 = vld [vmem:[%s1 + $0x20] sm:$0xff]
        %v237 = vld [vmem:[%s1 + $0x28] sm:$0xff]
        %v238 = vld [vmem:[%s1 + $0x30] sm:$0xff]
        %v239 = vld [vmem:[%s1 + $0x38] sm:$0xff]
        %vm240 = vcmask 39936
        %v242 = vsel %vm240, %v232, 0
        %v245 = vsel %vm240, %v233, 0
        %v248 = vsel %vm240, %v234, 0
        %v251 = vsel %vm240, %v235, 0
        %v254 = vsel %vm240, %v236, 0
        %v257 = vsel %vm240, %v237, 0
        %v260 = vsel %vm240, %v238, 0
        %v263 = vsel %vm240, %v239, 0
        %vm265 = vcmask 1044480
        %v267 = vsel %vm265, %v221, 0
        %v270 = vsel %vm265, %v222, 0
        %272 = vmatpush.msra.mxu0 0.0
        %273 = vmatpush.msra.mxu0 0.0
        %274 = vmatpush.msra.mxu0 0.0
        %275 = vmatpush.msra.mxu0 0.0
        %276 = vmatpush.msra.mxu0 0.0
        %277 = vmatpush.msra.mxu0 0.0
        %278 = vmatpush.msra.mxu0 0.0
        %279 = vmatpush.msra.mxu0 0.0
        %280 = vmatpush.msra.mxu0 0.0
        %281 = vmatpush.msra.mxu0 0.0
        %282 = vmatpush.msra.mxu0 0.0
        %283 = vmatpush.msra.mxu0 0.0
        %284 = vmatpush.msra.mxu0 0.0
        %285 = vmatpush.msra.mxu0 0.0
        %286 = vmatpush.msra.mxu0 0.0
        %287 = vmatpush.msra.mxu0 %v267
        %288 = vmatmul.f32.gmra.mxu0 %v242
        %v289 = vpop.f32.mrf.mxu0
        %v290 = vadd.f32 0.0, %v289
        %291 = vmatmul.f32.gmra.mxu0 %v245
        %v292 = vpop.f32.mrf.mxu0
        %v293 = vadd.f32 0.0, %v292
        %294 = vmatmul.f32.gmra.mxu0 %v248
        %v295 = vpop.f32.mrf.mxu0
        %v296 = vadd.f32 0.0, %v295
        %297 = vmatmul.f32.gmra.mxu0 %v251
        %v298 = vpop.f32.mrf.mxu0
        %v299 = vadd.f32 0.0, %v298
        %300 = vmatmul.f32.gmra.mxu0 %v254
        %v301 = vpop.f32.mrf.mxu0
        %v302 = vadd.f32 0.0, %v301
        %303 = vmatmul.f32.gmra.mxu0 %v257
        %v304 = vpop.f32.mrf.mxu0
        %v305 = vadd.f32 0.0, %v304
        %306 = vmatmul.f32.gmra.mxu0 %v260
        %v307 = vpop.f32.mrf.mxu0
        %v308 = vadd.f32 0.0, %v307
        %309 = vmatmul.f32.gmra.mxu0 %v263
        %v310 = vpop.f32.mrf.mxu0
        %v311 = vadd.f32 0.0, %v310
        %312 = vdwg.mxu0
        %313 = vmatpush.msra.mxu0 0.0
        %314 = vmatpush.msra.mxu0 0.0
        %315 = vmatpush.msra.mxu0 0.0
        %316 = vmatpush.msra.mxu0 0.0
        %317 = vmatpush.msra.mxu0 0.0
        %318 = vmatpush.msra.mxu0 0.0
        %319 = vmatpush.msra.mxu0 0.0
        %320 = vmatpush.msra.mxu0 0.0
        %321 = vmatpush.msra.mxu0 0.0
        %322 = vmatpush.msra.mxu0 0.0
        %323 = vmatpush.msra.mxu0 0.0
        %324 = vmatpush.msra.mxu0 0.0
        %325 = vmatpush.msra.mxu0 0.0
        %326 = vmatpush.msra.mxu0 0.0
        %327 = vmatpush.msra.mxu0 0.0
        %328 = vmatpush.msra.mxu0 %v270
        %329 = vmatmul.f32.gmra.mxu0 %v242
        %v330 = vpop.f32.mrf.mxu0
        %v331 = vadd.f32 0.0, %v330
        %332 = vmatmul.f32.gmra.mxu0 %v245
        %v333 = vpop.f32.mrf.mxu0
        %v334 = vadd.f32 0.0, %v333
        %335 = vmatmul.f32.gmra.mxu0 %v248
        %v336 = vpop.f32.mrf.mxu0
        %v337 = vadd.f32 0.0, %v336
        %338 = vmatmul.f32.gmra.mxu0 %v251
        %v339 = vpop.f32.mrf.mxu0
        %v340 = vadd.f32 0.0, %v339
        %341 = vmatmul.f32.gmra.mxu0 %v254
        %v342 = vpop.f32.mrf.mxu0
        %v343 = vadd.f32 0.0, %v342
        %344 = vmatmul.f32.gmra.mxu0 %v257
        %v345 = vpop.f32.mrf.mxu0
        %v346 = vadd.f32 0.0, %v345
        %347 = vmatmul.f32.gmra.mxu0 %v260
        %v348 = vpop.f32.mrf.mxu0
        %v349 = vadd.f32 0.0, %v348
        %350 = vmatmul.f32.gmra.mxu0 %v263
        %v351 = vpop.f32.mrf.mxu0
        %v352 = vadd.f32 0.0, %v351
        %353 = vdwg.mxu0
        %v354 = vmin.f32 %v290, %v296
        %v355 = vmin.f32 %v293, %v299
        %v356 = vmin.f32 %v354, %v302
        %v357 = vmin.f32 %v355, %v305
        %v358 = vmin.f32 %v356, %v308
        %v359 = vmin.f32 %v357, %v311
        %v360 = vmin.f32 %v358, %v359
        %v361 = vrot.slane %v360, 4
        %v362 = vmin.f32 %v360, %v361
        %v363 = vrot.slane %v362, 2
        %v364 = vmin.f32 %v362, %v363
        %v365 = vrot.slane %v364, 1
        %v366 = vmin.f32 %v364, %v365
        %v367 = vmin.f32 %v331, %v337
        %v368 = vmin.f32 %v334, %v340
        %v369 = vmin.f32 %v367, %v343
        %v370 = vmin.f32 %v368, %v346
        %v371 = vmin.f32 %v369, %v349
        %v372 = vmin.f32 %v370, %v352
        %v373 = vmin.f32 %v371, %v372
        %v374 = vrot.slane %v373, 4
        %v375 = vmin.f32 %v373, %v374
        %v376 = vrot.slane %v375, 2
        %v377 = vmin.f32 %v375, %v376
        %v378 = vrot.slane %v377, 1
        %v379 = vmin.f32 %v377, %v378
        %vm380 = vcmp.eq.f32.partialorder %v290, %v366
        %vm381 = vcmp.eq.f32.partialorder %v331, %v379
        %vm382 = vcmp.eq.f32.partialorder %v293, %v366
        %vm383 = vcmp.eq.f32.partialorder %v334, %v379
        %vm384 = vcmp.eq.f32.partialorder %v296, %v366
        %vm385 = vcmp.eq.f32.partialorder %v337, %v379
        %vm386 = vcmp.eq.f32.partialorder %v299, %v366
        %vm387 = vcmp.eq.f32.partialorder %v340, %v379
        %vm388 = vcmp.eq.f32.partialorder %v302, %v366
        %vm389 = vcmp.eq.f32.partialorder %v343, %v379
        %vm390 = vcmp.eq.f32.partialorder %v305, %v366
        %vm391 = vcmp.eq.f32.partialorder %v346, %v379
        %vm392 = vcmp.eq.f32.partialorder %v308, %v366
        %vm393 = vcmp.eq.f32.partialorder %v349, %v379
        %vm394 = vcmp.eq.f32.partialorder %v311, %v366
        %vm395 = vcmp.eq.f32.partialorder %v352, %v379
        %v396 = vsel %vm380, %v224, 64
        %v397 = vsel %vm381, %v224, 64
        %v398 = vsel %vm382, %v225, 64
        %v399 = vsel %vm383, %v225, 64
        %v400 = vsel %vm384, %v226, 64
        %v401 = vsel %vm385, %v226, 64
        %v402 = vsel %vm386, %v227, 64
        %v403 = vsel %vm387, %v227, 64
        %v404 = vsel %vm388, %v228, 64
        %v405 = vsel %vm389, %v228, 64
        %v406 = vsel %vm390, %v229, 64
        %v407 = vsel %vm391, %v229, 64
        %v408 = vsel %vm392, %v230, 64
        %v409 = vsel %vm393, %v230, 64
        %v410 = vsel %vm394, %v231, 64
        %v411 = vsel %vm395, %v231, 64
        %vm412 = vcmp.lt.s32.totalorder %v396, %v400
        %v413 = vsel %vm412, %v396, %v400
        %vm414 = vcmp.lt.s32.totalorder %v398, %v402
        %v415 = vsel %vm414, %v398, %v402
        %vm416 = vcmp.lt.s32.totalorder %v413, %v404
        %v417 = vsel %vm416, %v413, %v404
        %vm418 = vcmp.lt.s32.totalorder %v415, %v406
        %v419 = vsel %vm418, %v415, %v406
        %vm420 = vcmp.lt.s32.totalorder %v417, %v408
        %v421 = vsel %vm420, %v417, %v408
        %vm422 = vcmp.lt.s32.totalorder %v419, %v410
        %v423 = vsel %vm422, %v419, %v410
        %vm424 = vcmp.lt.s32.totalorder %v421, %v423
        %v425 = vsel %vm424, %v421, %v423
        %v426 = vrot.slane %v425, 4
        %vm427 = vcmp.lt.s32.totalorder %v425, %v426
        %v428 = vsel %vm427, %v425, %v426
        %v429 = vrot.slane %v428, 2
        %vm430 = vcmp.lt.s32.totalorder %v428, %v429
        %v431 = vsel %vm430, %v428, %v429
        %v432 = vrot.slane %v431, 1
        %vm433 = vcmp.lt.s32.totalorder %v431, %v432
        %v434 = vsel %vm433, %v431, %v432
        %vm435 = vcmp.lt.s32.totalorder %v397, %v401
        %v436 = vsel %vm435, %v397, %v401
        %vm437 = vcmp.lt.s32.totalorder %v399, %v403
        %v438 = vsel %vm437, %v399, %v403
        %vm439 = vcmp.lt.s32.totalorder %v436, %v405
        %v440 = vsel %vm439, %v436, %v405
        %vm441 = vcmp.lt.s32.totalorder %v438, %v407
        %v442 = vsel %vm441, %v438, %v407
        %vm443 = vcmp.lt.s32.totalorder %v440, %v409
        %v444 = vsel %vm443, %v440, %v409
        %vm445 = vcmp.lt.s32.totalorder %v442, %v411
        %v446 = vsel %vm445, %v442, %v411
        %vm447 = vcmp.lt.s32.totalorder %v444, %v446
        %v448 = vsel %vm447, %v444, %v446
        %v449 = vrot.slane %v448, 4
        %vm450 = vcmp.lt.s32.totalorder %v448, %v449
        %v451 = vsel %vm450, %v448, %v449
        %v452 = vrot.slane %v451, 2
        %vm453 = vcmp.lt.s32.totalorder %v451, %v452
        %v454 = vsel %vm453, %v451, %v452
        %v455 = vrot.slane %v454, 1
        %vm456 = vcmp.lt.s32.totalorder %v454, %v455
        %v457 = vsel %vm456, %v454, %v455
        %vm458 = vcmp.lt.f32.partialorder %v366, inf
        %vm459 = vcmp.lt.f32.partialorder %v379, inf
        %v460 = vsel %vm458, %v434, 0
        %v461 = vsel %vm459, %v457, 0
        %vm462 = vcmp.eq.s32.totalorder %v224, %v460
        %vm463 = vcmp.eq.s32.totalorder %v224, %v461
        %vm464 = vcmp.eq.s32.totalorder %v225, %v460
        %vm465 = vcmp.eq.s32.totalorder %v225, %v461
        %vm466 = vcmp.eq.s32.totalorder %v226, %v460
        %vm467 = vcmp.eq.s32.totalorder %v226, %v461
        %vm468 = vcmp.eq.s32.totalorder %v227, %v460
        %vm469 = vcmp.eq.s32.totalorder %v227, %v461
        %vm470 = vcmp.eq.s32.totalorder %v228, %v460
        %vm471 = vcmp.eq.s32.totalorder %v228, %v461
        %vm472 = vcmp.eq.s32.totalorder %v229, %v460
        %vm473 = vcmp.eq.s32.totalorder %v229, %v461
        %vm474 = vcmp.eq.s32.totalorder %v230, %v460
        %vm475 = vcmp.eq.s32.totalorder %v230, %v461
        %vm476 = vcmp.eq.s32.totalorder %v231, %v460
        %vm477 = vcmp.eq.s32.totalorder %v231, %v461
        %v478 = vsel %vm462, 1, 0
        %v479 = vsel %vm463, 1, 0
        %v480 = vsel %vm464, 1, 0
        %v481 = vsel %vm465, 1, 0
        %v482 = vsel %vm466, 1, 0
        %v483 = vsel %vm467, 1, 0
        %v484 = vsel %vm468, 1, 0
        %v485 = vsel %vm469, 1, 0
        %v486 = vsel %vm470, 1, 0
        %v487 = vsel %vm471, 1, 0
        %v488 = vsel %vm472, 1, 0
        %v489 = vsel %vm473, 1, 0
        %v490 = vsel %vm474, 1, 0
        %v491 = vsel %vm475, 1, 0
        %v492 = vsel %vm476, 1, 0
        %v493 = vsel %vm477, 1, 0
        %v494 = vcvt.s32.f32 %v478
        %v495 = vcvt.s32.f32 %v479
        %v496 = vcvt.s32.f32 %v480
        %v497 = vcvt.s32.f32 %v481
        %v498 = vcvt.s32.f32 %v482
        %v499 = vcvt.s32.f32 %v483
        %v500 = vcvt.s32.f32 %v484
        %v501 = vcvt.s32.f32 %v485
        %v502 = vcvt.s32.f32 %v486
        %v503 = vcvt.s32.f32 %v487
        %v504 = vcvt.s32.f32 %v488
        %v505 = vcvt.s32.f32 %v489
        %v506 = vcvt.s32.f32 %v490
        %v507 = vcvt.s32.f32 %v491
        %v508 = vcvt.s32.f32 %v492
        %v509 = vcvt.s32.f32 %v493
        %510 = vxpose.xlu0.b32.start [1/16] %v232, 128
        %511 = vxpose.xlu0.b32.cont [2/16] %v233, 128
        %512 = vxpose.xlu0.b32.cont [3/16] %v234, 128
        %513 = vxpose.xlu0.b32.cont [4/16] %v235, 128
        %514 = vxpose.xlu0.b32.cont [5/16] %v236, 128
        %515 = vxpose.xlu0.b32.cont [6/16] %v237, 128
        %516 = vxpose.xlu0.b32.cont [7/16] %v238, 128
        %517 = vxpose.xlu0.b32.cont [8/16] %v239, 128
        %518 = vxpose.xlu0.b32.cont [9/16] 0.0, 128
        %519 = vxpose.xlu0.b32.cont [10/16] 0.0, 128
        %520 = vxpose.xlu0.b32.cont [11/16] 0.0, 128
        %521 = vxpose.xlu0.b32.cont [12/16] 0.0, 128
        %522 = vxpose.xlu0.b32.cont [13/16] 0.0, 128
        %523 = vxpose.xlu0.b32.cont [14/16] 0.0, 128
        %524 = vxpose.xlu0.b32.cont [15/16] 0.0, 128
        %525 = vxpose.xlu0.b32.end [16/16] 0.0, 128
        %v526 = vpop.trf.xlu0
        %v527 = vpop.trf.xlu0
        %v528 = vpop.trf.xlu0
        %v529 = vpop.trf.xlu0
        %v530 = vpop.trf.xlu0
        %v531 = vpop.trf.xlu0
        %v532 = vpop.trf.xlu0
        %v533 = vpop.trf.xlu0
        %v534 = vpop.trf.xlu0
        %v535 = vpop.trf.xlu0
        %v536 = vpop.trf.xlu0
        %v537 = vpop.trf.xlu0
        %v538 = vpop.trf.xlu0
        %v539 = vpop.trf.xlu0
        %v540 = vpop.trf.xlu0
        %v541 = vpop.trf.xlu0
        %vm542 = vcmask 523264
        %v544 = vsel %vm542, %v526, 0
        %546 = vmatpush.msra.mxu0 0.0
        %547 = vmatpush.msra.mxu0 0.0
        %548 = vmatpush.msra.mxu0 0.0
        %549 = vmatpush.msra.mxu0 0.0
        %550 = vmatpush.msra.mxu0 0.0
        %551 = vmatpush.msra.mxu0 0.0
        %552 = vmatpush.msra.mxu0 0.0
        %553 = vmatpush.msra.mxu0 0.0
        %554 = vmatpush.msra.mxu0 %v508
        %555 = vmatpush.msra.mxu0 %v506
        %556 = vmatpush.msra.mxu0 %v504
        %557 = vmatpush.msra.mxu0 %v502
        %558 = vmatpush.msra.mxu0 %v500
        %559 = vmatpush.msra.mxu0 %v498
        %560 = vmatpush.msra.mxu0 %v496
        %561 = vmatpush.msra.mxu0 %v494
        %562 = vmatmul.f32.gmra.mxu0 %v544
        %v563 = vpop.f32.mrf.mxu0
        %v564 = vadd.f32 0.0, %v563
        %565 = vdwg.mxu0
        %566 = vmatpush.msra.mxu0 0.0
        %567 = vmatpush.msra.mxu0 0.0
        %568 = vmatpush.msra.mxu0 0.0
        %569 = vmatpush.msra.mxu0 0.0
        %570 = vmatpush.msra.mxu0 0.0
        %571 = vmatpush.msra.mxu0 0.0
        %572 = vmatpush.msra.mxu0 0.0
        %573 = vmatpush.msra.mxu0 0.0
        %574 = vmatpush.msra.mxu0 %v509
        %575 = vmatpush.msra.mxu0 %v507
        %576 = vmatpush.msra.mxu0 %v505
        %577 = vmatpush.msra.mxu0 %v503
        %578 = vmatpush.msra.mxu0 %v501
        %579 = vmatpush.msra.mxu0 %v499
        %580 = vmatpush.msra.mxu0 %v497
        %581 = vmatpush.msra.mxu0 %v495
        %582 = vmatmul.f32.gmra.mxu0 %v544
        %v583 = vpop.f32.mrf.mxu0
        %v584 = vadd.f32 0.0, %v583
        %585 = vdwg.mxu0
        %v586 = vmul.f32 %v564, -0.5
        %v587 = vmul.f32 %v584, -0.5
        %588 = vst [vmem:[#allocation1] ss:$2 sm:$0xff] %v213
        %v589 = vld.sshfl [vmem:[#allocation1] sm:$0xff pattern:$0x75316420]
        %v590 = vld.sshfl [vmem:[#allocation1 + $0x8] sm:$0xff pattern:$0x75316420]
        %v593 = vsub.f32 %v586, %v589
        %v594 = vsub.f32 %v587, %v590
        %v597 = vrot.slane %v587, 4
        %v598 = vsel %vm220, %v586, %v597
        %600 = vst [vmem:[%s194] sm:$0xff] %v598
        %v601 = vmul.f32 %v593, %v593
        %v602 = vmul.f32 %v594, %v594
        %v603 = vsel %vm220, %v601, 0.0
        %v604 = vsel %vm220, %v602, 0.0
        %v605 = vadd.f32 %v603, %v604
        %606 = vadd.xlane.f32.xlu0 %v605
        %v607 = vpop.xlane.xlu0 %606
        %v608 = vrot.slane %v607, 4
        %v609 = vadd.f32 %v607, %v608
        %v610 = vrot.slane %v609, 2
        %v611 = vadd.f32 %v609, %v610
        %v612 = vrot.slane %v611, 1
        %v613 = vadd.f32 %v611, %v612
        %s614 = vtos %v613
        %v615 = vstv %s614
        %616 = vst [vmem:[%s201] sm:$0xff] %v615
        %s617 = sand.u32 %s92, 1
        %s618 = scalar_lea.sflag [#allocation3], %s617
        %s619 = sand.u32 %s92, 1
        %s620 = smul.addr %s619, 8
        %s621 = scalar_lea.vmem [#allocation2], %s620
        %s622 = sand.u32 %s120, 1
        %s623 = scalar_lea.sflag [#allocation5], %s622
        %s624 = sand.u32 %s120, 1
        %s625 = smul.addr %s624, 8
        %s626 = scalar_lea.vmem [#allocation4], %s625
        // Predicated region
        $region29: #{tpu_custom_call.1} parent=27 // pred_check
          %p627 = pneg %p102
        $region30: #{tpu_custom_call.1} parent=27 // pred_check_branch
          %629 = sbr.rel (%p627) target = $region32
        $region31: #{tpu_custom_call.1} parent=27 // pred_region
          %s630 = smul.u32 2, %s26
          %632 = vsyncadd %s618, 0
          %s633 = smul.addr %s25, 2
          %s634 = sadd.s32 %s630, %s633
          %s635 = smul.addr %s634, 4
          %s636 = scalar_lea.hbm %s2, %s635
          %s638 = sshll.u32 %s621, 4
          %s639 = int_to_ptr.vmem [resolvable:$true] %s638
          %s640 = sshll.u32 %s636, 4
          %s641 = int_to_ptr.hbm [resolvable:$true] %s640
          %643 = dma.vmem_to_hbm [thread:$0]  %s639, 128, %s641, %s618
        $region32: #{tpu_custom_call.1} parent=27 // pred_fallthru
          _
        // Predicated region
        $region33: #{tpu_custom_call.1} parent=27 // pred_check
          %p644 = pneg %p130
        $region34: #{tpu_custom_call.1} parent=27 // pred_check_branch
          %646 = sbr.rel (%p644) target = $region36
        $region35: #{tpu_custom_call.1} parent=27 // pred_region
          %648 = vsyncadd %s623, 0
          %s649 = sadd.s32 %s26, %s25
          %s650 = smul.addr %s649, 8
          %s651 = scalar_lea.hbm %s3, %s650
          %s653 = sshll.u32 %s626, 4
          %s654 = int_to_ptr.vmem [resolvable:$true] %s653
          %s655 = sshll.u32 %s651, 4
          %s656 = int_to_ptr.hbm [resolvable:$true] %s655
          %658 = dma.vmem_to_hbm [thread:$0]  %s654, 128, %s656, %s623
        $region36: #{tpu_custom_call.1} parent=27 // pred_fallthru
          _
      $region28: #{tpu_custom_call.1} parent=5 // pred_fallthru
        _
      %p659 = scmp.le.s32.totalorder 2, %s16
      // Predicated region
      $region37: #{tpu_custom_call.1} parent=5 // pred_check
        %p660 = pneg %p659
      $region38: #{tpu_custom_call.1} parent=5 // pred_check_branch
        %662 = sbr.rel (%p660) target = $region40
      $region39: #{tpu_custom_call.1} parent=5 // pred_region
        %s663 = ssub.s32 %s16, 2
        // Predicated region
        $region41: #{tpu_custom_call.1} parent=39 // pred_check
          %p664 = pneg %p108
        $region42: #{tpu_custom_call.1} parent=39 // pred_check_branch
          %666 = sbr.rel (%p664) target = $region44
        $region43: #{tpu_custom_call.1} parent=39 // pred_region
          %s667 = sand.u32 %s93, 1
          %s668 = scalar_lea.sflag [#allocation3], %s667
          %s669 = sand.u32 %s93, 1
          %s670 = smul.addr %s669, 8
          %s671 = scalar_lea.vmem [#allocation2], %s670
          %673 = dma.done %s668, 128
        $region44: #{tpu_custom_call.1} parent=39 // pred_fallthru
          _
        // Predicated region
        $region45: #{tpu_custom_call.1} parent=39 // pred_check
          %p674 = pneg %p136
        $region46: #{tpu_custom_call.1} parent=39 // pred_check_branch
          %676 = sbr.rel (%p674) target = $region48
        $region47: #{tpu_custom_call.1} parent=39 // pred_region
          %s677 = sand.u32 %s121, 1
          %s678 = scalar_lea.sflag [#allocation5], %s677
          %s679 = sand.u32 %s121, 1
          %s680 = smul.addr %s679, 8
          %s681 = scalar_lea.vmem [#allocation4], %s680
          %683 = dma.done %s678, 128
        $region48: #{tpu_custom_call.1} parent=39 // pred_fallthru
          _
      $region40: #{tpu_custom_call.1} parent=5 // pred_fallthru
        _
    $region6: #{tpu_custom_call.1} parent=1 // loop_footer
      %s20 = sadd.s32 1, %s16
    $region7: #{tpu_custom_call.1} parent=1 // loop_footer_branch
      %15 = sbr.rel target = $region3
    $region8: #{tpu_custom_call.1} parent=1 // loop_exit
      _
    %684 = vsyncpa [#allocation3], 1
    %s685 = scalar_lea.sflag [#allocation3], 1
    %686 = vsyncpa %s685, 1
    %687 = vsyncpa [#allocation5], 1
    %s688 = scalar_lea.sflag [#allocation5], 1
    %689 = vsyncpa %s688, 1

</llo_original>
